<compile_context>
chip_gen: v6e
topology: v6e:2x2x1
jax: 0.10.0
libtpu: 0.0.40
codegen_flags: <defaults>
</compile_context>

<pallas_src>
import jax
import jax.numpy as jnp
from jax.experimental import pallas as pl
from jax.experimental.pallas import tpu as pltpu


def _round_up(n, m):
    return ((n + m - 1) // m) * m


# Packed parameter layout (26 f32 scalars, read from SMEM inside the kernel):
#   [0:15)  w1[j, k] at index 3*j + k   (fc1 weight, torch layout (5, 3))
#   [15:20) b1[j]    at index 15 + j
#   [20:25) w2[0, j] at index 20 + j    (fc2 weight, torch layout (1, 5))
#   [25]    b2[0]
_IN, _HID, _OUT = 3, 5, 1
_NPARAMS = _HID * _IN + _HID + _OUT * _HID + _OUT  # 26


def pack_params(w1, b1, w2, b2):
    """Pack torch-layout Linear params into one flat f32 vector (call once at init)."""
    return jnp.concatenate(
        [w1.reshape(-1), b1.reshape(-1), w2.reshape(-1), b2.reshape(-1)]
    ).astype(jnp.float32)


def mlp_kernel(params_ref, x_ref, o_ref):
    # x_ref: (3, TB) VMEM block, batch on lanes.  params_ref: (26,) f32 in SMEM.
    x0 = x_ref[0:1, :]   # (1, TB)
    x1 = x_ref[1:2, :]
    x2 = x_ref[2:3, :]
    acc = None
    for j in range(_HID):                          # fully unrolled: ~20 VPU FMAs total
        hj = (params_ref[3 * j + 0] * x0
              + params_ref[3 * j + 1] * x1
              + params_ref[3 * j + 2] * x2
              + params_ref[15 + j])                # fc1 row j + bias
        hj = jnp.maximum(hj, 0.0)                  # ReLU
        term = params_ref[20 + j] * hj             # fc2 weight j
        acc = term if acc is None else acc + term
    o_ref[...] = (acc + params_ref[25]).astype(o_ref.dtype)   # + fc2 bias, lane-dense (1, TB) store


def simple_mlp_forward(x, params, *, tb=1024):
    """x: (B, 3).  params: packed (26,) f32 from pack_params().  Returns (B, 1) f32."""
    B = x.shape[0]
    tb = min(tb, _round_up(B, 128))        # lane tile: multiple of 128, capped at 1024
    B_pad = _round_up(B, tb)               # pad batch so the grid divides evenly

    x = x.astype(jnp.float32)
    x_pad = x if B_pad == B else jnp.pad(x, ((0, B_pad - B), (0, 0)))
    xT = x_pad.T                           # (3, B_pad): batch on lanes (lane-dense loads)

    out = pl.pallas_call(
        mlp_kernel,
        out_shape=jax.ShapeDtypeStruct((_OUT, B_pad), jnp.float32),
        grid=(B_pad // tb,),
        in_specs=[
            # params: whole 26-element vector, SMEM-resident across all grid steps.
            pl.BlockSpec(memory_space=pltpu.MemorySpace.SMEM),
            # x tile: lane-dense (3, TB) block marching along the batch/lane axis.
            pl.BlockSpec((_IN, tb), lambda i: (0, i)),
        ],
        # output tile: lane-dense (1, TB) block (unmasked stores).
        out_specs=pl.BlockSpec((_OUT, tb), lambda i: (0, i)),
        compiler_params=pltpu.CompilerParams(
            dimension_semantics=("parallel",)),
    )(params, xT)

    return out[0, :B].reshape(B, 1)        # back to the module's (B, 1) contract


if __name__ == "__main__":
    key = jax.random.PRNGKey(0)
    kx, kw1, kb1, kw2, kb2 = jax.random.split(key, 5)

    B = 8
    # torch.nn.Linear layouts: weight (out, in), bias (out,)
    w1 = jax.random.uniform(kw1, (_HID, _IN), jnp.float32, -0.5, 0.5)
    b1 = jax.random.uniform(kb1, (_HID,), jnp.float32, -0.5, 0.5)
    w2 = jax.random.uniform(kw2, (_OUT, _HID), jnp.float32, -0.5, 0.5)
    b2 = jax.random.uniform(kb2, (_OUT,), jnp.float32, -0.5, 0.5)
    x = jax.random.normal(kx, (B, _IN), jnp.float32)

    # One-time, init-side packing (out of the per-call hot path).
    params = pack_params(w1, b1, w2, b2)

    y = simple_mlp_forward(x, params)
    jax.block_until_ready(y)

    # Reference: same math as the PyTorch module (x @ W1^T + b1 -> ReLU -> @ W2^T + b2).
    h_ref = jnp.maximum(x @ w1.T + b1, 0.0)
    y_ref = h_ref @ w2.T + b2
    assert y.shape == (B, _OUT), y.shape
    assert jnp.allclose(y, y_ref, atol=1e-5, rtol=1e-5), float(jnp.max(jnp.abs(y - y_ref)))

    print("KERNEL_OK")
</pallas_src>

<mosaic_0001>
module attributes {stable_mosaic.version = 11 : i64} {
  func.func @mlp_kernel(%arg0: i32, %arg1: memref<26xf32, #tpu.memory_space<smem>>, %arg2: memref<3x128xf32, #tpu.memory_space<vmem>>, %arg3: memref<1x128xf32, #tpu.memory_space<vmem>>) attributes {dimension_semantics = [#tpu.dimension_semantics<parallel>], iteration_bounds = array<i64: 1>, scalar_prefetch = 0 : i64, scratch_operands = 0 : i64, tpu.core_type = #tpu.core_type<tc>, window_params = [{transform_indices = @transform_0, window_bounds = array<i64: 26>}, {transform_indices = @transform_1, window_bounds = array<i64: 3, 128>}, {transform_indices = @transform_2, window_bounds = array<i64: 1, 128>}]} {
    %c0 = arith.constant 0 : index
    %c0_0 = arith.constant 0 : index
    %0 = vector.load %arg2[%c0, %c0_0] : memref<3x128xf32, #tpu.memory_space<vmem>>, vector<1x128xf32>
    %c1 = arith.constant 1 : index
    %c0_1 = arith.constant 0 : index
    %1 = vector.load %arg2[%c1, %c0_1] : memref<3x128xf32, #tpu.memory_space<vmem>>, vector<1x128xf32>
    %c2 = arith.constant 2 : index
    %c0_2 = arith.constant 0 : index
    %2 = vector.load %arg2[%c2, %c0_2] : memref<3x128xf32, #tpu.memory_space<vmem>>, vector<1x128xf32>
    %c0_3 = arith.constant 0 : index
    %3 = memref.load %arg1[%c0_3] : memref<26xf32, #tpu.memory_space<smem>>
    %4 = vector.broadcast %3 : f32 to vector<1x128xf32>
    %5 = arith.mulf %4, %0 : vector<1x128xf32>
    %c1_4 = arith.constant 1 : index
    %6 = memref.load %arg1[%c1_4] : memref<26xf32, #tpu.memory_space<smem>>
    %7 = vector.broadcast %6 : f32 to vector<1x128xf32>
    %8 = arith.mulf %7, %1 : vector<1x128xf32>
    %9 = arith.addf %5, %8 : vector<1x128xf32>
    %c2_5 = arith.constant 2 : index
    %10 = memref.load %arg1[%c2_5] : memref<26xf32, #tpu.memory_space<smem>>
    %11 = vector.broadcast %10 : f32 to vector<1x128xf32>
    %12 = arith.mulf %11, %2 : vector<1x128xf32>
    %13 = arith.addf %9, %12 : vector<1x128xf32>
    %c15 = arith.constant 15 : index
    %14 = memref.load %arg1[%c15] : memref<26xf32, #tpu.memory_space<smem>>
    %15 = vector.broadcast %14 : f32 to vector<1x128xf32>
    %16 = arith.addf %13, %15 : vector<1x128xf32>
    %cst = arith.constant 0.000000e+00 : f32
    %17 = vector.broadcast %cst : f32 to vector<1x128xf32>
    %18 = arith.maximumf %16, %17 : vector<1x128xf32>
    %c20 = arith.constant 20 : index
    %19 = memref.load %arg1[%c20] : memref<26xf32, #tpu.memory_space<smem>>
    %20 = vector.broadcast %19 : f32 to vector<1x128xf32>
    %21 = arith.mulf %20, %18 : vector<1x128xf32>
    %c3 = arith.constant 3 : index
    %22 = memref.load %arg1[%c3] : memref<26xf32, #tpu.memory_space<smem>>
    %23 = vector.broadcast %22 : f32 to vector<1x128xf32>
    %24 = arith.mulf %23, %0 : vector<1x128xf32>
    %c4 = arith.constant 4 : index
    %25 = memref.load %arg1[%c4] : memref<26xf32, #tpu.memory_space<smem>>
    %26 = vector.broadcast %25 : f32 to vector<1x128xf32>
    %27 = arith.mulf %26, %1 : vector<1x128xf32>
    %28 = arith.addf %24, %27 : vector<1x128xf32>
    %c5 = arith.constant 5 : index
    %29 = memref.load %arg1[%c5] : memref<26xf32, #tpu.memory_space<smem>>
    %30 = vector.broadcast %29 : f32 to vector<1x128xf32>
    %31 = arith.mulf %30, %2 : vector<1x128xf32>
    %32 = arith.addf %28, %31 : vector<1x128xf32>
    %c16 = arith.constant 16 : index
    %33 = memref.load %arg1[%c16] : memref<26xf32, #tpu.memory_space<smem>>
    %34 = vector.broadcast %33 : f32 to vector<1x128xf32>
    %35 = arith.addf %32, %34 : vector<1x128xf32>
    %cst_6 = arith.constant 0.000000e+00 : f32
    %36 = vector.broadcast %cst_6 : f32 to vector<1x128xf32>
    %37 = arith.maximumf %35, %36 : vector<1x128xf32>
    %c21 = arith.constant 21 : index
    %38 = memref.load %arg1[%c21] : memref<26xf32, #tpu.memory_space<smem>>
    %39 = vector.broadcast %38 : f32 to vector<1x128xf32>
    %40 = arith.mulf %39, %37 : vector<1x128xf32>
    %41 = arith.addf %21, %40 : vector<1x128xf32>
    %c6 = arith.constant 6 : index
    %42 = memref.load %arg1[%c6] : memref<26xf32, #tpu.memory_space<smem>>
    %43 = vector.broadcast %42 : f32 to vector<1x128xf32>
    %44 = arith.mulf %43, %0 : vector<1x128xf32>
    %c7 = arith.constant 7 : index
    %45 = memref.load %arg1[%c7] : memref<26xf32, #tpu.memory_space<smem>>
    %46 = vector.broadcast %45 : f32 to vector<1x128xf32>
    %47 = arith.mulf %46, %1 : vector<1x128xf32>
    %48 = arith.addf %44, %47 : vector<1x128xf32>
    %c8 = arith.constant 8 : index
    %49 = memref.load %arg1[%c8] : memref<26xf32, #tpu.memory_space<smem>>
    %50 = vector.broadcast %49 : f32 to vector<1x128xf32>
    %51 = arith.mulf %50, %2 : vector<1x128xf32>
    %52 = arith.addf %48, %51 : vector<1x128xf32>
    %c17 = arith.constant 17 : index
    %53 = memref.load %arg1[%c17] : memref<26xf32, #tpu.memory_space<smem>>
    %54 = vector.broadcast %53 : f32 to vector<1x128xf32>
    %55 = arith.addf %52, %54 : vector<1x128xf32>
    %cst_7 = arith.constant 0.000000e+00 : f32
    %56 = vector.broadcast %cst_7 : f32 to vector<1x128xf32>
    %57 = arith.maximumf %55, %56 : vector<1x128xf32>
    %c22 = arith.constant 22 : index
    %58 = memref.load %arg1[%c22] : memref<26xf32, #tpu.memory_space<smem>>
    %59 = vector.broadcast %58 : f32 to vector<1x128xf32>
    %60 = arith.mulf %59, %57 : vector<1x128xf32>
    %61 = arith.addf %41, %60 : vector<1x128xf32>
    %c9 = arith.constant 9 : index
    %62 = memref.load %arg1[%c9] : memref<26xf32, #tpu.memory_space<smem>>
    %63 = vector.broadcast %62 : f32 to vector<1x128xf32>
    %64 = arith.mulf %63, %0 : vector<1x128xf32>
    %c10 = arith.constant 10 : index
    %65 = memref.load %arg1[%c10] : memref<26xf32, #tpu.memory_space<smem>>
    %66 = vector.broadcast %65 : f32 to vector<1x128xf32>
    %67 = arith.mulf %66, %1 : vector<1x128xf32>
    %68 = arith.addf %64, %67 : vector<1x128xf32>
    %c11 = arith.constant 11 : index
    %69 = memref.load %arg1[%c11] : memref<26xf32, #tpu.memory_space<smem>>
    %70 = vector.broadcast %69 : f32 to vector<1x128xf32>
    %71 = arith.mulf %70, %2 : vector<1x128xf32>
    %72 = arith.addf %68, %71 : vector<1x128xf32>
    %c18 = arith.constant 18 : index
    %73 = memref.load %arg1[%c18] : memref<26xf32, #tpu.memory_space<smem>>
    %74 = vector.broadcast %73 : f32 to vector<1x128xf32>
    %75 = arith.addf %72, %74 : vector<1x128xf32>
    %cst_8 = arith.constant 0.000000e+00 : f32
    %76 = vector.broadcast %cst_8 : f32 to vector<1x128xf32>
    %77 = arith.maximumf %75, %76 : vector<1x128xf32>
    %c23 = arith.constant 23 : index
    %78 = memref.load %arg1[%c23] : memref<26xf32, #tpu.memory_space<smem>>
    %79 = vector.broadcast %78 : f32 to vector<1x128xf32>
    %80 = arith.mulf %79, %77 : vector<1x128xf32>
    %81 = arith.addf %61, %80 : vector<1x128xf32>
    %c12 = arith.constant 12 : index
    %82 = memref.load %arg1[%c12] : memref<26xf32, #tpu.memory_space<smem>>
    %83 = vector.broadcast %82 : f32 to vector<1x128xf32>
    %84 = arith.mulf %83, %0 : vector<1x128xf32>
    %c13 = arith.constant 13 : index
    %85 = memref.load %arg1[%c13] : memref<26xf32, #tpu.memory_space<smem>>
    %86 = vector.broadcast %85 : f32 to vector<1x128xf32>
    %87 = arith.mulf %86, %1 : vector<1x128xf32>
    %88 = arith.addf %84, %87 : vector<1x128xf32>
    %c14 = arith.constant 14 : index
    %89 = memref.load %arg1[%c14] : memref<26xf32, #tpu.memory_space<smem>>
    %90 = vector.broadcast %89 : f32 to vector<1x128xf32>
    %91 = arith.mulf %90, %2 : vector<1x128xf32>
    %92 = arith.addf %88, %91 : vector<1x128xf32>
    %c19 = arith.constant 19 : index
    %93 = memref.load %arg1[%c19] : memref<26xf32, #tpu.memory_space<smem>>
    %94 = vector.broadcast %93 : f32 to vector<1x128xf32>
    %95 = arith.addf %92, %94 : vector<1x128xf32>
    %cst_9 = arith.constant 0.000000e+00 : f32
    %96 = vector.broadcast %cst_9 : f32 to vector<1x128xf32>
    %97 = arith.maximumf %95, %96 : vector<1x128xf32>
    %c24 = arith.constant 24 : index
    %98 = memref.load %arg1[%c24] : memref<26xf32, #tpu.memory_space<smem>>
    %99 = vector.broadcast %98 : f32 to vector<1x128xf32>
    %100 = arith.mulf %99, %97 : vector<1x128xf32>
    %101 = arith.addf %81, %100 : vector<1x128xf32>
    %c25 = arith.constant 25 : index
    %102 = memref.load %arg1[%c25] : memref<26xf32, #tpu.memory_space<smem>>
    %103 = vector.broadcast %102 : f32 to vector<1x128xf32>
    %104 = arith.addf %101, %103 : vector<1x128xf32>
    %c0_10 = arith.constant 0 : index
    %c0_11 = arith.constant 0 : index
    %105 = vector.load %arg3[%c0_10, %c0_11] : memref<1x128xf32, #tpu.memory_space<vmem>>, vector<1x128xf32>
    tpu.vector_store %arg3[%c0_10, %c0_11], %104 {strides = array<i32>} : memref<1x128xf32, #tpu.memory_space<vmem>>, vector<1x128xf32>,
    return
  }
  func.func @transform_0(%arg0: i32) -> i32 {
    %c0_i32 = arith.constant 0 : i32
    %c0_i32_0 = arith.constant 0 : i32
    return %c0_i32 : i32
  }
  func.func @transform_1(%arg0: i32) -> (i32, i32) {
    %c0_i32 = arith.constant 0 : i32
    %c0_i32_0 = arith.constant 0 : i32
    return %c0_i32, %arg0 : i32, i32
  }
  func.func @transform_2(%arg0: i32) -> (i32, i32) {
    %c0_i32 = arith.constant 0 : i32
    %c0_i32_0 = arith.constant 0 : i32
    return %c0_i32, %arg0 : i32, i32
  }
}

</mosaic_0001>

<llo_original>
// kernel: tpu_custom_call.1
$region0: #{tpu_custom_call.1}
  #allocation0 [shape = 'u32[]', space=smem, size = 0x4, offset = 0x4, fixed_abs, tag = 'smem constant byte address 0x4 - core index']
  #allocation1 [shape = 'u32[144,128]{1,0:T(1,128)}', space=vmem, size = 0x12000, scoped, tag = 'internal scratch']
  %s0 = inlined_call_operand.hbm [shape: f32[26], index: 0, kind: input, shape index: {}]
  %s1 = inlined_call_operand.hbm [shape: f32[3,128], index: 1, kind: input, shape index: {}]
  %s2 = inlined_call_operand.hbm [shape: f32[1,128], index: 2, kind: output, shape index: {}]
  %s3 = sld [smem:[#allocation0]]
  $region26: #{tpu_custom_call.1} parent=0
    _
  %s5 = ssub.s32 1, %s3
  %s6 = scalar_select 0, %s5, %s3
  $region1: #{tpu_custom_call.1} parent=0
    #allocation2 [shape = 'u8[512]{0}', space=smem, size = 0x200, scoped, tag = 'input window, operand 0, single buffered']
    #allocation3 [shape = 's32[1]{0}', space=sflag, size = 0x4, scoped, tag = 'scoped memory for tpu_custom_call.1']
    #allocation4 [shape = 's32[1]{0}', space=sflag, size = 0x4, scoped, tag = 'scoped memory for tpu_custom_call.1']
    #allocation5 [shape = 's32[1]{0}', space=sflag, size = 0x4, scoped, tag = 'scoped memory for tpu_custom_call.1']
    #allocation6 [shape = 'u8[2048]{0}', space=vmem, size = 0x800, scoped, tag = 'input window, operand 1, single buffered']
    #allocation7 [shape = 'u8[512]{0}', space=vmem, size = 0x400, scoped, tag = 'output window, operand 0, single buffered']
    %7 = vsyncpa [#allocation5], 0
    %8 = vsyncpa [#allocation3], 0
    %9 = vsyncpa [#allocation4], 0
    // Predicated region
    $region2: #{tpu_custom_call.1} parent=1 // pred_check
      _
    $region3: #{tpu_custom_call.1} parent=1 // pred_check_branch
      %11 = sbr.rel (0) target = $region5
    $region4: #{tpu_custom_call.1} parent=1 // pred_region
      %s13 = ssub.s32 16, 16
      %14 = vsyncadd [#allocation5], %s13
      %17 = dma.hbm_to_smem %s0, 16, [#allocation2], [#allocation5]
    $region5: #{tpu_custom_call.1} parent=1 // pred_fallthru
      _
    // Predicated region
    $region6: #{tpu_custom_call.1} parent=1 // pred_check
      _
    $region7: #{tpu_custom_call.1} parent=1 // pred_check_branch
      %19 = sbr.rel (0) target = $region9
    $region8: #{tpu_custom_call.1} parent=1 // pred_region
      %s21 = ssub.s32 64, 64
      %22 = vsyncadd [#allocation3], %s21
      %s24 = sshll.u32 [#allocation6], 4
      %s25 = int_to_ptr.vmem [resolvable:$true] %s24
      %27 = dma.hbm_to_vmem [thread:$0]  %s1, 64, %s25, [#allocation3]
    $region9: #{tpu_custom_call.1} parent=1 // pred_fallthru
      _
    // Predicated region
    $region10: #{tpu_custom_call.1} parent=1 // pred_check
      _
    $region11: #{tpu_custom_call.1} parent=1 // pred_check_branch
      %29 = sbr.rel (0) target = $region13
    $region12: #{tpu_custom_call.1} parent=1 // pred_region
      %30 = dma.done [#allocation5], 16
    $region13: #{tpu_custom_call.1} parent=1 // pred_fallthru
      _
    // Predicated region
    $region14: #{tpu_custom_call.1} parent=1 // pred_check
      _
    $region15: #{tpu_custom_call.1} parent=1 // pred_check_branch
      %32 = sbr.rel (0) target = $region17
    $region16: #{tpu_custom_call.1} parent=1 // pred_region
      %33 = dma.done [#allocation3], 64
    $region17: #{tpu_custom_call.1} parent=1 // pred_fallthru
      _
    %34 = sfence
    %v35 = vld [vmem:[#allocation6] sm:$0x1]
    %v36 = vld [vmem:[#allocation6 + $0x1] sm:$0x1]
    %v37 = vld [vmem:[#allocation6 + $0x2] sm:$0x1]
    %s38 = sld [smem:[#allocation2]]
    %v39 = vstv %s38
    %v40 = vmul.f32 %v39, %v35
    %s41 = sld [smem:[#allocation2 + $0x1]]
    %v42 = vstv %s41
    %v43 = vmul.f32 %v42, %v36
    %v44 = vadd.f32 %v40, %v43
    %s45 = sld [smem:[#allocation2 + $0x2]]
    %v46 = vstv %s45
    %v47 = vmul.f32 %v46, %v37
    %v48 = vadd.f32 %v44, %v47
    %s49 = sld [smem:[#allocation2 + $0xf]]
    %v50 = vstv %s49
    %v51 = vadd.f32 %v48, %v50
    %v52 = vmax.f32 %v51, 0.0
    %s53 = sld [smem:[#allocation2 + $0x14]]
    %v54 = vstv %s53
    %v55 = vmul.f32 %v54, %v52
    %s56 = sld [smem:[#allocation2 + $0x3]]
    %v57 = vstv %s56
    %v58 = vmul.f32 %v57, %v35
    %s59 = sld [smem:[#allocation2 + $0x4]]
    %v60 = vstv %s59
    %v61 = vmul.f32 %v60, %v36
    %v62 = vadd.f32 %v58, %v61
    %s63 = sld [smem:[#allocation2 + $0x5]]
    %v64 = vstv %s63
    %v65 = vmul.f32 %v64, %v37
    %v66 = vadd.f32 %v62, %v65
    %s67 = sld [smem:[#allocation2 + $0x10]]
    %v68 = vstv %s67
    %v69 = vadd.f32 %v66, %v68
    %v70 = vmax.f32 %v69, 0.0
    %s71 = sld [smem:[#allocation2 + $0x15]]
    %v72 = vstv %s71
    %v73 = vmul.f32 %v72, %v70
    %v74 = vadd.f32 %v55, %v73
    %s75 = sld [smem:[#allocation2 + $0x6]]
    %v76 = vstv %s75
    %v77 = vmul.f32 %v76, %v35
    %s78 = sld [smem:[#allocation2 + $0x7]]
    %v79 = vstv %s78
    %v80 = vmul.f32 %v79, %v36
    %v81 = vadd.f32 %v77, %v80
    %s82 = sld [smem:[#allocation2 + $0x8]]
    %v83 = vstv %s82
    %v84 = vmul.f32 %v83, %v37
    %v85 = vadd.f32 %v81, %v84
    %s86 = sld [smem:[#allocation2 + $0x11]]
    %v87 = vstv %s86
    %v88 = vadd.f32 %v85, %v87
    %v89 = vmax.f32 %v88, 0.0
    %s90 = sld [smem:[#allocation2 + $0x16]]
    %v91 = vstv %s90
    %v92 = vmul.f32 %v91, %v89
    %v93 = vadd.f32 %v74, %v92
    %s94 = sld [smem:[#allocation2 + $0x9]]
    %v95 = vstv %s94
    %v96 = vmul.f32 %v95, %v35
    %s97 = sld [smem:[#allocation2 + $0xa]]
    %v98 = vstv %s97
    %v99 = vmul.f32 %v98, %v36
    %v100 = vadd.f32 %v96, %v99
    %s101 = sld [smem:[#allocation2 + $0xb]]
    %v102 = vstv %s101
    %v103 = vmul.f32 %v102, %v37
    %v104 = vadd.f32 %v100, %v103
    %s105 = sld [smem:[#allocation2 + $0x12]]
    %v106 = vstv %s105
    %v107 = vadd.f32 %v104, %v106
    %v108 = vmax.f32 %v107, 0.0
    %s109 = sld [smem:[#allocation2 + $0x17]]
    %v110 = vstv %s109
    %v111 = vmul.f32 %v110, %v108
    %v112 = vadd.f32 %v93, %v111
    %s113 = sld [smem:[#allocation2 + $0xc]]
    %v114 = vstv %s113
    %v115 = vmul.f32 %v114, %v35
    %s116 = sld [smem:[#allocation2 + $0xd]]
    %v117 = vstv %s116
    %v118 = vmul.f32 %v117, %v36
    %v119 = vadd.f32 %v115, %v118
    %s120 = sld [smem:[#allocation2 + $0xe]]
    %v121 = vstv %s120
    %v122 = vmul.f32 %v121, %v37
    %v123 = vadd.f32 %v119, %v122
    %s124 = sld [smem:[#allocation2 + $0x13]]
    %v125 = vstv %s124
    %v126 = vadd.f32 %v123, %v125
    %v127 = vmax.f32 %v126, 0.0
    %s128 = sld [smem:[#allocation2 + $0x18]]
    %v129 = vstv %s128
    %v130 = vmul.f32 %v129, %v127
    %v131 = vadd.f32 %v112, %v130
    %s132 = sld [smem:[#allocation2 + $0x19]]
    %v133 = vstv %s132
    %v134 = vadd.f32 %v131, %v133
    %135 = vst [vmem:[#allocation7] sm:$0x1] %v134
    // Predicated region
    $region18: #{tpu_custom_call.1} parent=1 // pred_check
      _
    $region19: #{tpu_custom_call.1} parent=1 // pred_check_branch
      %137 = sbr.rel (0) target = $region21
    $region20: #{tpu_custom_call.1} parent=1 // pred_region
      %s139 = ssub.s32 16, 16
      %140 = vsyncadd [#allocation4], %s139
      %s142 = sshll.u32 [#allocation7], 4
      %s143 = int_to_ptr.vmem [resolvable:$true] %s142
      %145 = dma.vmem_to_hbm [thread:$0]  %s143, 16, %s2, [#allocation4]
    $region21: #{tpu_custom_call.1} parent=1 // pred_fallthru
      _
    // Predicated region
    $region22: #{tpu_custom_call.1} parent=1 // pred_check
      _
    $region23: #{tpu_custom_call.1} parent=1 // pred_check_branch
      %147 = sbr.rel (0) target = $region25
    $region24: #{tpu_custom_call.1} parent=1 // pred_region
      %148 = dma.done [#allocation4], 16
    $region25: #{tpu_custom_call.1} parent=1 // pred_fallthru
      _
    %149 = vsyncpa [#allocation3], 1
    %150 = vsyncpa [#allocation4], 1
    %151 = vsyncpa [#allocation5], 1

</llo_original>
